<compile_context>
chip_gen: v5e
topology: v5e:2x2
jax: 0.10.0
libtpu: 0.0.40
codegen_flags: <defaults>
</compile_context>

<pallas_src>
import numpy as np
import jax
import jax.numpy as jnp
from jax.experimental import pallas as pl
from jax.experimental.pallas import tpu as pltpu

MAX = 1.0
MIN = -1.0
MAX_SIGMA = 0.01
MIN_SIGMA = 0.0001
LN_EPS = 1e-5  # PyTorch LayerNorm default


def _round_up(n, m):
    return ((n + m - 1) // m) * m


def transition_kernel(x_ref, w1_ref, b1_ref, g_ref, beta_ref,
                      wh_ref, bh_ref, scale_ref, off_ref, out_ref):
    # fc: Linear(D_in -> H); full-precision f32 MXU path pinned explicitly.
    h = jnp.dot(x_ref[...], w1_ref[...],
                preferred_element_type=jnp.float32,
                precision=jax.lax.Precision.HIGHEST) + b1_ref[...]

    # ln: LayerNorm over last axis, one-pass statistics so the two XLU
    # reductions (sum, sum of squares) are independent.
    mean = jnp.mean(h, axis=-1, keepdims=True)
    mean_sq = jnp.mean(h * h, axis=-1, keepdims=True)
    var = mean_sq - mean * mean
    hn = (h - mean) * jax.lax.rsqrt(var + LN_EPS) * g_ref[...] + beta_ref[...]

    # relu
    hn = jnp.maximum(hn, 0.0)

    # fused heads: one matmul producing [mu_logits | sigma_logits]
    z = jnp.dot(hn, wh_ref[...],
                preferred_element_type=jnp.float32,
                precision=jax.lax.Precision.HIGHEST) + bh_ref[...]
    s = jax.nn.sigmoid(z)

    # per-lane affine (precomputed resident constants):
    # lanes [:D_out] -> mu transform, lanes [D_out:] -> sigma transform
    out_ref[...] = s * scale_ref[...] + off_ref[...]


def probabilistic_transition_model(x, params, block_b=2048, min_grid_steps=4):
    """x: (B, encoder_feature_dim + action_shape) float32. Returns (mu, sigma)."""
    B, D_in = x.shape
    H = params["w1"].shape[1]
    D_out = params["w_mu"].shape[1]
    two_d = 2 * D_out

    # Batch tile: multiple of 8, sized so the grid has >= min_grid_steps steps
    # (keeps auto double-buffering alive and shards the batch axis across both
    # v7x TensorCores), capped at block_b for VMEM headroom.
    tb = min(max(_round_up(-(-B // min_grid_steps), 8), 8), block_b)
    nb = pl.cdiv(B, tb)  # ragged last block: Pallas masks the OOB writeback

    # pack the two heads into one lane-dense weight/bias
    w_heads = jnp.concatenate([params["w_mu"], params["w_sigma"]], axis=1)
    b_heads = jnp.concatenate([params["b_mu"], params["b_sigma"]], axis=1)

    # per-lane affine constants, built once on the host, kept resident in VMEM
    is_mu = np.arange(two_d) < D_out
    scale = jnp.asarray(
        np.where(is_mu, MAX - MIN, MAX_SIGMA - MIN_SIGMA), jnp.float32
    ).reshape(1, two_d)
    offset = jnp.asarray(
        np.where(is_mu, MIN, MIN_SIGMA), jnp.float32
    ).reshape(1, two_d)

    def resident(shape):
        # constant block index -> tensor stays resident in VMEM across steps
        return pl.BlockSpec(shape, lambda i: (0, 0))

    cost = pl.CostEstimate(
        flops=2 * B * (D_in * H + H * two_d),
        transcendentals=B * (two_d + 1),          # sigmoids + rsqrt
        bytes_accessed=4 * (B * D_in + D_in * H + 3 * H
                            + H * two_d + 3 * two_d + B * two_d),
    )

    out = pl.pallas_call(
        transition_kernel,
        out_shape=jax.ShapeDtypeStruct((B, two_d), jnp.float32),
        grid_spec=pltpu.PrefetchScalarGridSpec(
            num_scalar_prefetch=0,
            grid=(nb,),
            in_specs=[
                pl.BlockSpec((tb, D_in), lambda i: (i, 0)),   # x tile
                resident((D_in, H)),                          # w1
                resident((1, H)),                             # b1
                resident((1, H)),                             # gamma
                resident((1, H)),                             # beta
                resident((H, two_d)),                         # fused head W
                resident((1, two_d)),                         # fused head b
                resident((1, two_d)),                         # per-lane scale
                resident((1, two_d)),                         # per-lane offset
            ],
            out_specs=pl.BlockSpec((tb, two_d), lambda i: (i, 0)),
        ),
        compiler_params=pltpu.CompilerParams(
            dimension_semantics=("parallel",),
            vmem_limit_bytes=48 * 1024 * 1024,
        ),
        cost_estimate=cost,
    )(x, params["w1"], params["b1"], params["gamma"], params["beta"],
      w_heads, b_heads, scale, offset)

    mu = out[:, :D_out]
    sigma = out[:, D_out:]
    return mu, sigma


def init_params(key, encoder_feature_dim, action_shape, layer_width):
    d_in = encoder_feature_dim + action_shape
    ks = jax.random.split(key, 6)
    scale1 = 1.0 / jnp.sqrt(d_in)
    scale2 = 1.0 / jnp.sqrt(layer_width)
    return {
        # weights stored as (in, out); biases as (1, out) for 2-D broadcast
        "w1": jax.random.normal(ks[0], (d_in, layer_width), jnp.float32) * scale1,
        "b1": jax.random.normal(ks[1], (1, layer_width), jnp.float32) * scale1,
        "gamma": jnp.ones((1, layer_width), jnp.float32),
        "beta": jnp.zeros((1, layer_width), jnp.float32),
        "w_mu": jax.random.normal(ks[2], (layer_width, encoder_feature_dim), jnp.float32) * scale2,
        "b_mu": jax.random.normal(ks[3], (1, encoder_feature_dim), jnp.float32) * scale2,
        "w_sigma": jax.random.normal(ks[4], (layer_width, encoder_feature_dim), jnp.float32) * scale2,
        "b_sigma": jax.random.normal(ks[5], (1, encoder_feature_dim), jnp.float32) * scale2,
    }


def reference(x, p):
    hp = jax.lax.Precision.HIGHEST
    h = jnp.dot(x, p["w1"], precision=hp) + p["b1"]
    mean = jnp.mean(h, axis=-1, keepdims=True)
    var = jnp.mean((h - mean) ** 2, axis=-1, keepdims=True)
    h = (h - mean) / jnp.sqrt(var + LN_EPS) * p["gamma"] + p["beta"]
    h = jnp.maximum(h, 0.0)
    mu = jax.nn.sigmoid(jnp.dot(h, p["w_mu"], precision=hp) + p["b_mu"]) * (MAX - MIN) + MIN
    sg = MIN_SIGMA + (MAX_SIGMA - MIN_SIGMA) * jax.nn.sigmoid(
        jnp.dot(h, p["w_sigma"], precision=hp) + p["b_sigma"])
    return mu, sg


if __name__ == "__main__":
    # Small shapes consistent with the module's forward.
    encoder_feature_dim = 32
    action_shape = 4
    layer_width = 128
    batch = 20   # ragged vs tb=8: exercises 3 grid steps + masked last block

    key = jax.random.PRNGKey(0)
    k_x, k_p = jax.random.split(key)

    params = init_params(k_p, encoder_feature_dim, action_shape, layer_width)
    x = jax.random.normal(k_x, (batch, encoder_feature_dim + action_shape), jnp.float32)

    mu, sigma = probabilistic_transition_model(x, params)
    jax.block_until_ready((mu, sigma))

    mu_ref, sigma_ref = reference(x, params)
    assert jnp.allclose(mu, mu_ref, atol=1e-5), "mu mismatch"
    assert jnp.allclose(sigma, sigma_ref, atol=1e-7), "sigma mismatch"

    # TODO(synk): torch.distributions.Normal object has no Pallas equivalent;
    # we return its parameters (mu, sigma) instead.
    print("KERNEL_OK")
</pallas_src>

<mosaic_0001>
module attributes {stable_mosaic.version = 11 : i64} {
  func.func @transition_kernel(%arg0: i32, %arg1: memref<8x36xf32, #tpu.memory_space<vmem>>, %arg2: memref<36x128xf32, #tpu.memory_space<vmem>>, %arg3: memref<1x128xf32, #tpu.memory_space<vmem>>, %arg4: memref<1x128xf32, #tpu.memory_space<vmem>>, %arg5: memref<1x128xf32, #tpu.memory_space<vmem>>, %arg6: memref<128x64xf32, #tpu.memory_space<vmem>>, %arg7: memref<1x64xf32, #tpu.memory_space<vmem>>, %arg8: memref<1x64xf32, #tpu.memory_space<vmem>>, %arg9: memref<1x64xf32, #tpu.memory_space<vmem>>, %arg10: memref<8x64xf32, #tpu.memory_space<vmem>>) attributes {dimension_semantics = [#tpu.dimension_semantics<parallel>], iteration_bounds = array<i64: 3>, scalar_prefetch = 0 : i64, scratch_operands = 0 : i64, tpu.core_type = #tpu.core_type<tc>, window_params = [{transform_indices = @transform_0, window_bounds = array<i64: 8, 36>}, {pipeline_mode = #tpu.pipeline_mode<synchronous>, transform_indices = @transform_1, window_bounds = array<i64: 36, 128>}, {pipeline_mode = #tpu.pipeline_mode<synchronous>, transform_indices = @transform_2, window_bounds = array<i64: 1, 128>}, {pipeline_mode = #tpu.pipeline_mode<synchronous>, transform_indices = @transform_3, window_bounds = array<i64: 1, 128>}, {pipeline_mode = #tpu.pipeline_mode<synchronous>, transform_indices = @transform_4, window_bounds = array<i64: 1, 128>}, {pipeline_mode = #tpu.pipeline_mode<synchronous>, transform_indices = @transform_5, window_bounds = array<i64: 128, 64>}, {pipeline_mode = #tpu.pipeline_mode<synchronous>, transform_indices = @transform_6, window_bounds = array<i64: 1, 64>}, {pipeline_mode = #tpu.pipeline_mode<synchronous>, transform_indices = @transform_7, window_bounds = array<i64: 1, 64>}, {pipeline_mode = #tpu.pipeline_mode<synchronous>, transform_indices = @transform_8, window_bounds = array<i64: 1, 64>}, {transform_indices = @transform_9, window_bounds = array<i64: 8, 64>}]} {
    %c0 = arith.constant 0 : index
    %c0_0 = arith.constant 0 : index
    %0 = vector.load %arg1[%c0, %c0_0] : memref<8x36xf32, #tpu.memory_space<vmem>>, vector<8x36xf32>
    %c0_1 = arith.constant 0 : index
    %c0_2 = arith.constant 0 : index
    %1 = vector.load %arg2[%c0_1, %c0_2] : memref<36x128xf32, #tpu.memory_space<vmem>>, vector<36x128xf32>
    %cst = arith.constant dense<0.000000e+00> : vector<8x128xf32>
    %2 = tpu.matmul %0, %1, %cst {dimension_numbers = #tpu.dot_dimension_numbers<[1], [0], [0], [1], [0, 0, 1, 1], [], []>, precision = #tpu.contract_precision<fp32>} : vector<8x36xf32>, vector<36x128xf32>, vector<8x128xf32> -> vector<8x128xf32>
    %c0_3 = arith.constant 0 : index
    %c0_4 = arith.constant 0 : index
    %3 = vector.load %arg3[%c0_3, %c0_4] : memref<1x128xf32, #tpu.memory_space<vmem>>, vector<1x128xf32>
    %4 = vector.broadcast %3 : vector<1x128xf32> to vector<8x128xf32>
    %5 = arith.addf %2, %4 : vector<8x128xf32>
    %cst_5 = arith.constant dense<0.000000e+00> : vector<8xf32>
    %6 = vector.multi_reduction <add>, %5, %cst_5 [1] : vector<8x128xf32> to vector<8xf32>
    %7 = vector.shape_cast %6 : vector<8xf32> to vector<8x1xf32>
    %cst_6 = arith.constant 1.280000e+02 : f32
    %8 = vector.broadcast %cst_6 : f32 to vector<8x1xf32>
    %9 = arith.divf %7, %8 : vector<8x1xf32>
    %10 = arith.mulf %5, %5 : vector<8x128xf32>
    %cst_7 = arith.constant dense<0.000000e+00> : vector<8xf32>
    %11 = vector.multi_reduction <add>, %10, %cst_7 [1] : vector<8x128xf32> to vector<8xf32>
    %12 = vector.shape_cast %11 : vector<8xf32> to vector<8x1xf32>
    %cst_8 = arith.constant 1.280000e+02 : f32
    %13 = vector.broadcast %cst_8 : f32 to vector<8x1xf32>
    %14 = arith.divf %12, %13 : vector<8x1xf32>
    %15 = arith.mulf %9, %9 : vector<8x1xf32>
    %16 = arith.subf %14, %15 : vector<8x1xf32>
    %17 = vector.broadcast %9 : vector<8x1xf32> to vector<8x128xf32>
    %18 = arith.subf %5, %17 : vector<8x128xf32>
    %cst_9 = arith.constant 9.99999974E-6 : f32
    %19 = vector.broadcast %cst_9 : f32 to vector<8x1xf32>
    %20 = arith.addf %16, %19 : vector<8x1xf32>
    %21 = math.rsqrt %20 : vector<8x1xf32>
    %22 = vector.broadcast %21 : vector<8x1xf32> to vector<8x128xf32>
    %23 = arith.mulf %18, %22 : vector<8x128xf32>
    %c0_10 = arith.constant 0 : index
    %c0_11 = arith.constant 0 : index
    %24 = vector.load %arg4[%c0_10, %c0_11] : memref<1x128xf32, #tpu.memory_space<vmem>>, vector<1x128xf32>
    %25 = vector.broadcast %24 : vector<1x128xf32> to vector<8x128xf32>
    %26 = arith.mulf %23, %25 : vector<8x128xf32>
    %c0_12 = arith.constant 0 : index
    %c0_13 = arith.constant 0 : index
    %27 = vector.load %arg5[%c0_12, %c0_13] : memref<1x128xf32, #tpu.memory_space<vmem>>, vector<1x128xf32>
    %28 = vector.broadcast %27 : vector<1x128xf32> to vector<8x128xf32>
    %29 = arith.addf %26, %28 : vector<8x128xf32>
    %cst_14 = arith.constant 0.000000e+00 : f32
    %30 = vector.broadcast %cst_14 : f32 to vector<8x128xf32>
    %31 = arith.maximumf %29, %30 : vector<8x128xf32>
    %c0_15 = arith.constant 0 : index
    %c0_16 = arith.constant 0 : index
    %32 = vector.load %arg6[%c0_15, %c0_16] : memref<128x64xf32, #tpu.memory_space<vmem>>, vector<128x64xf32>
    %cst_17 = arith.constant dense<0.000000e+00> : vector<8x64xf32>
    %33 = tpu.matmul %31, %32, %cst_17 {dimension_numbers = #tpu.dot_dimension_numbers<[1], [0], [0], [1], [0, 0, 1, 1], [], []>, precision = #tpu.contract_precision<fp32>} : vector<8x128xf32>, vector<128x64xf32>, vector<8x64xf32> -> vector<8x64xf32>
    %c0_18 = arith.constant 0 : index
    %c0_19 = arith.constant 0 : index
    %34 = vector.load %arg7[%c0_18, %c0_19] : memref<1x64xf32, #tpu.memory_space<vmem>>, vector<1x64xf32>
    %35 = vector.broadcast %34 : vector<1x64xf32> to vector<8x64xf32>
    %36 = arith.addf %33, %35 : vector<8x64xf32>
    %37 = arith.negf %36 : vector<8x64xf32>
    %38 = math.exp %37 : vector<8x64xf32>
    %cst_20 = arith.constant 1.000000e+00 : f32
    %39 = vector.broadcast %cst_20 : f32 to vector<8x64xf32>
    %40 = arith.addf %39, %38 : vector<8x64xf32>
    %41 = arith.divf %39, %40 : vector<8x64xf32>
    %c0_21 = arith.constant 0 : index
    %c0_22 = arith.constant 0 : index
    %42 = vector.load %arg8[%c0_21, %c0_22] : memref<1x64xf32, #tpu.memory_space<vmem>>, vector<1x64xf32>
    %43 = vector.broadcast %42 : vector<1x64xf32> to vector<8x64xf32>
    %44 = arith.mulf %41, %43 : vector<8x64xf32>
    %c0_23 = arith.constant 0 : index
    %c0_24 = arith.constant 0 : index
    %45 = vector.load %arg9[%c0_23, %c0_24] : memref<1x64xf32, #tpu.memory_space<vmem>>, vector<1x64xf32>
    %46 = vector.broadcast %45 : vector<1x64xf32> to vector<8x64xf32>
    %47 = arith.addf %44, %46 : vector<8x64xf32>
    %c0_25 = arith.constant 0 : index
    %c0_26 = arith.constant 0 : index
    %48 = vector.load %arg10[%c0_25, %c0_26] : memref<8x64xf32, #tpu.memory_space<vmem>>, vector<8x64xf32>
    tpu.vector_store %arg10[%c0_25, %c0_26], %47 {strides = array<i32>} : memref<8x64xf32, #tpu.memory_space<vmem>>, vector<8x64xf32>,
    return
  }
  func.func @transform_0(%arg0: i32) -> (i32, i32) {
    %c0_i32 = arith.constant 0 : i32
    %c0_i32_0 = arith.constant 0 : i32
    return %arg0, %c0_i32 : i32, i32
  }
  func.func @transform_1(%arg0: i32) -> (i32, i32) {
    %c0_i32 = arith.constant 0 : i32
    %c0_i32_0 = arith.constant 0 : i32
    %c0_i32_1 = arith.constant 0 : i32
    return %c0_i32, %c0_i32_0 : i32, i32
  }
  func.func @transform_2(%arg0: i32) -> (i32, i32) {
    %c0_i32 = arith.constant 0 : i32
    %c0_i32_0 = arith.constant 0 : i32
    %c0_i32_1 = arith.constant 0 : i32
    return %c0_i32, %c0_i32_0 : i32, i32
  }
  func.func @transform_3(%arg0: i32) -> (i32, i32) {
    %c0_i32 = arith.constant 0 : i32
    %c0_i32_0 = arith.constant 0 : i32
    %c0_i32_1 = arith.constant 0 : i32
    return %c0_i32, %c0_i32_0 : i32, i32
  }
  func.func @transform_4(%arg0: i32) -> (i32, i32) {
    %c0_i32 = arith.constant 0 : i32
    %c0_i32_0 = arith.constant 0 : i32
    %c0_i32_1 = arith.constant 0 : i32
    return %c0_i32, %c0_i32_0 : i32, i32
  }
  func.func @transform_5(%arg0: i32) -> (i32, i32) {
    %c0_i32 = arith.constant 0 : i32
    %c0_i32_0 = arith.constant 0 : i32
    %c0_i32_1 = arith.constant 0 : i32
    return %c0_i32, %c0_i32_0 : i32, i32
  }
  func.func @transform_6(%arg0: i32) -> (i32, i32) {
    %c0_i32 = arith.constant 0 : i32
    %c0_i32_0 = arith.constant 0 : i32
    %c0_i32_1 = arith.constant 0 : i32
    return %c0_i32, %c0_i32_0 : i32, i32
  }
  func.func @transform_7(%arg0: i32) -> (i32, i32) {
    %c0_i32 = arith.constant 0 : i32
    %c0_i32_0 = arith.constant 0 : i32
    %c0_i32_1 = arith.constant 0 : i32
    return %c0_i32, %c0_i32_0 : i32, i32
  }
  func.func @transform_8(%arg0: i32) -> (i32, i32) {
    %c0_i32 = arith.constant 0 : i32
    %c0_i32_0 = arith.constant 0 : i32
    %c0_i32_1 = arith.constant 0 : i32
    return %c0_i32, %c0_i32_0 : i32, i32
  }
  func.func @transform_9(%arg0: i32) -> (i32, i32) {
    %c0_i32 = arith.constant 0 : i32
    %c0_i32_0 = arith.constant 0 : i32
    return %arg0, %c0_i32 : i32, i32
  }
}

</mosaic_0001>

<llo_original>
// kernel: tpu_custom_call.1
$region0: #{tpu_custom_call.1}
  #allocation0 [shape = 'u32[]', space=smem, size = 0x4, offset = 0x4, fixed_abs, tag = 'smem constant byte address 0x4 - core index']
  #allocation1 [shape = 'u32[72,128]{1,0:T(1,128)}', space=vmem, size = 0x9000, scoped, tag = 'internal scratch']
  %s0 = inlined_call_operand.vmem [shape: f32[20,36], index: 0, kind: input, shape index: {}]
  %s1 = inlined_call_operand.vmem [shape: f32[36,128], index: 1, kind: input, shape index: {}]
  %s2 = inlined_call_operand.vmem [shape: f32[1,128], index: 2, kind: input, shape index: {}]
  %s3 = inlined_call_operand.vmem [shape: f32[1,128], index: 3, kind: input, shape index: {}]
  %s4 = inlined_call_operand.vmem [shape: f32[1,128], index: 4, kind: input, shape index: {}]
  %s5 = inlined_call_operand.vmem [shape: f32[128,64], index: 5, kind: input, shape index: {}]
  %s6 = inlined_call_operand.vmem [shape: f32[1,64], index: 6, kind: input, shape index: {}]
  %s7 = inlined_call_operand.vmem [shape: f32[1,64], index: 7, kind: input, shape index: {}]
  %s8 = inlined_call_operand.vmem [shape: f32[1,64], index: 8, kind: input, shape index: {}]
  %s9 = inlined_call_operand.hbm [shape: f32[20,64], index: 9, kind: output, shape index: {}]
  %s10 = sld [smem:[#allocation0]]
  $region69: #{tpu_custom_call.1} parent=0
    _
  %s12 = ssub.s32 1, %s10
  %s13 = scalar_select 0, %s12, %s10
  $region1: #{tpu_custom_call.1} parent=0
    #allocation2 [shape = 'u8[8192]{0}', space=vmem, size = 0x2000, scoped, tag = 'output window, operand 0']
    #allocation3 [shape = 's32[2]{0}', space=sflag, size = 0x8, scoped, tag = 'scoped memory for tpu_custom_call.1']
    %14 = vsyncpa [#allocation3], 0
    %s15 = scalar_lea.sflag [#allocation3], 1
    %16 = vsyncpa %s15, 0
    loop: start=0, step=1, limit=5
    $region2: #{tpu_custom_call.1} parent=1 // loop_pre_header
      _
    $region3: #{tpu_custom_call.1} parent=1 // loop_header
      %s18 = sphi 0, %s22
      %p19 = scmp.ge.s32.totalorder %s18, 5
      %s28 = sphi 0, %s30
      %s31 = sphi 0, %s28
      %s32 = sphi 0, %s31
      %s48 = sphi 0, %s32
      %s52 = sphi 0, %s52
      %s54 = sphi 0, %s52
      %s55 = sphi 0, %s54
      %s69 = sphi 0, %s55
      %s73 = sphi 0, %s73
      %s75 = sphi 0, %s73
      %s76 = sphi 0, %s75
      %s90 = sphi 0, %s76
      %s94 = sphi 0, %s94
      %s96 = sphi 0, %s94
      %s97 = sphi 0, %s96
      %s111 = sphi 0, %s97
      %s115 = sphi 0, %s115
      %s117 = sphi 0, %s115
      %s118 = sphi 0, %s117
      %s132 = sphi 0, %s118
      %s136 = sphi 0, %s136
      %s138 = sphi 0, %s136
      %s139 = sphi 0, %s138
      %s153 = sphi 0, %s139
      %s157 = sphi 0, %s157
      %s159 = sphi 0, %s157
      %s160 = sphi 0, %s159
      %s174 = sphi 0, %s160
      %s178 = sphi 0, %s178
      %s180 = sphi 0, %s178
      %s181 = sphi 0, %s180
      %s195 = sphi 0, %s181
      %s199 = sphi 0, %s199
      %s201 = sphi 0, %s199
      %s202 = sphi 0, %s201
      %s216 = sphi 0, %s202
      %s222 = sphi 0, %s224
      %s225 = sphi 0, %s222
      %s226 = sphi 0, %s225
      %s242 = sphi 0, %s226
    $region4: #{tpu_custom_call.1} parent=1 // loop_header_branch
      %21 = sbr.rel (%p19) target = $region8
    $region5: #{tpu_custom_call.1} parent=1 // loop_body
      %s23 = ssub.s32 %s18, 1
      %s24 = ssub.s32 %s18, 2
      %s25 = sadd.s32 %s18, 1
      %s26 = ssub.s32 %s18, %s25
      %p27 = scmp.eq.s32.totalorder %s26, 0
      %s29 = sadd.s32 %s28, 1
      %s30 = scalar_select %p27, %s28, %s29
      %p33 = pneg %p27
      %p34 = scmp.eq.s32.totalorder %s18, 2
      %p35 = por %p33, %p34
      %p36 = scmp.ne.s32.totalorder %s28, %s31
      %p37 = scmp.eq.s32.totalorder %s18, 0
      %p38 = por %p36, %p37
      %p39 = scmp.ne.s32.totalorder %s28, %s31
      %p40 = scmp.eq.s32.totalorder %s23, 2
      %p41 = por %p39, %p40
      %p42 = scmp.ne.s32.totalorder %s31, %s32
      %p43 = scmp.eq.s32.totalorder %s23, 0
      %p44 = por %p42, %p43
      %p45 = scmp.ne.s32.totalorder %s31, %s32
      %p46 = scmp.eq.s32.totalorder %s24, 2
      %p47 = por %p45, %p46
      %p49 = scmp.ne.s32.totalorder %s32, %s48
      %p50 = scmp.eq.s32.totalorder %s24, 0
      %p51 = por %p49, %p50
      %s53 = sadd.s32 %s52, 1
      %p56 = scmp.eq.s32.totalorder %s18, 2
      %p57 = scmp.ne.s32.totalorder %s52, %s54
      %p58 = scmp.eq.s32.totalorder %s18, 0
      %p59 = por %p57, %p58
      %p60 = scmp.ne.s32.totalorder %s52, %s54
      %p61 = scmp.eq.s32.totalorder %s23, 2
      %p62 = por %p60, %p61
      %p63 = scmp.ne.s32.totalorder %s54, %s55
      %p64 = scmp.eq.s32.totalorder %s23, 0
      %p65 = por %p63, %p64
      %p66 = scmp.ne.s32.totalorder %s54, %s55
      %p67 = scmp.eq.s32.totalorder %s24, 2
      %p68 = por %p66, %p67
      %p70 = scmp.ne.s32.totalorder %s55, %s69
      %p71 = scmp.eq.s32.totalorder %s24, 0
      %p72 = por %p70, %p71
      %s74 = sadd.s32 %s73, 1
      %p77 = scmp.eq.s32.totalorder %s18, 2
      %p78 = scmp.ne.s32.totalorder %s73, %s75
      %p79 = scmp.eq.s32.totalorder %s18, 0
      %p80 = por %p78, %p79
      %p81 = scmp.ne.s32.totalorder %s73, %s75
      %p82 = scmp.eq.s32.totalorder %s23, 2
      %p83 = por %p81, %p82
      %p84 = scmp.ne.s32.totalorder %s75, %s76
      %p85 = scmp.eq.s32.totalorder %s23, 0
      %p86 = por %p84, %p85
      %p87 = scmp.ne.s32.totalorder %s75, %s76
      %p88 = scmp.eq.s32.totalorder %s24, 2
      %p89 = por %p87, %p88
      %p91 = scmp.ne.s32.totalorder %s76, %s90
      %p92 = scmp.eq.s32.totalorder %s24, 0
      %p93 = por %p91, %p92
      %s95 = sadd.s32 %s94, 1
      %p98 = scmp.eq.s32.totalorder %s18, 2
      %p99 = scmp.ne.s32.totalorder %s94, %s96
      %p100 = scmp.eq.s32.totalorder %s18, 0
      %p101 = por %p99, %p100
      %p102 = scmp.ne.s32.totalorder %s94, %s96
      %p103 = scmp.eq.s32.totalorder %s23, 2
      %p104 = por %p102, %p103
      %p105 = scmp.ne.s32.totalorder %s96, %s97
      %p106 = scmp.eq.s32.totalorder %s23, 0
      %p107 = por %p105, %p106
      %p108 = scmp.ne.s32.totalorder %s96, %s97
      %p109 = scmp.eq.s32.totalorder %s24, 2
      %p110 = por %p108, %p109
      %p112 = scmp.ne.s32.totalorder %s97, %s111
      %p113 = scmp.eq.s32.totalorder %s24, 0
      %p114 = por %p112, %p113
      %s116 = sadd.s32 %s115, 1
      %p119 = scmp.eq.s32.totalorder %s18, 2
      %p120 = scmp.ne.s32.totalorder %s115, %s117
      %p121 = scmp.eq.s32.totalorder %s18, 0
      %p122 = por %p120, %p121
      %p123 = scmp.ne.s32.totalorder %s115, %s117
      %p124 = scmp.eq.s32.totalorder %s23, 2
      %p125 = por %p123, %p124
      %p126 = scmp.ne.s32.totalorder %s117, %s118
      %p127 = scmp.eq.s32.totalorder %s23, 0
      %p128 = por %p126, %p127
      %p129 = scmp.ne.s32.totalorder %s117, %s118
      %p130 = scmp.eq.s32.totalorder %s24, 2
      %p131 = por %p129, %p130
      %p133 = scmp.ne.s32.totalorder %s118, %s132
      %p134 = scmp.eq.s32.totalorder %s24, 0
      %p135 = por %p133, %p134
      %s137 = sadd.s32 %s136, 1
      %p140 = scmp.eq.s32.totalorder %s18, 2
      %p141 = scmp.ne.s32.totalorder %s136, %s138
      %p142 = scmp.eq.s32.totalorder %s18, 0
      %p143 = por %p141, %p142
      %p144 = scmp.ne.s32.totalorder %s136, %s138
      %p145 = scmp.eq.s32.totalorder %s23, 2
      %p146 = por %p144, %p145
      %p147 = scmp.ne.s32.totalorder %s138, %s139
      %p148 = scmp.eq.s32.totalorder %s23, 0
      %p149 = por %p147, %p148
      %p150 = scmp.ne.s32.totalorder %s138, %s139
      %p151 = scmp.eq.s32.totalorder %s24, 2
      %p152 = por %p150, %p151
      %p154 = scmp.ne.s32.totalorder %s139, %s153
      %p155 = scmp.eq.s32.totalorder %s24, 0
      %p156 = por %p154, %p155
      %s158 = sadd.s32 %s157, 1
      %p161 = scmp.eq.s32.totalorder %s18, 2
      %p162 = scmp.ne.s32.totalorder %s157, %s159
      %p163 = scmp.eq.s32.totalorder %s18, 0
      %p164 = por %p162, %p163
      %p165 = scmp.ne.s32.totalorder %s157, %s159
      %p166 = scmp.eq.s32.totalorder %s23, 2
      %p167 = por %p165, %p166
      %p168 = scmp.ne.s32.totalorder %s159, %s160
      %p169 = scmp.eq.s32.totalorder %s23, 0
      %p170 = por %p168, %p169
      %p171 = scmp.ne.s32.totalorder %s159, %s160
      %p172 = scmp.eq.s32.totalorder %s24, 2
      %p173 = por %p171, %p172
      %p175 = scmp.ne.s32.totalorder %s160, %s174
      %p176 = scmp.eq.s32.totalorder %s24, 0
      %p177 = por %p175, %p176
      %s179 = sadd.s32 %s178, 1
      %p182 = scmp.eq.s32.totalorder %s18, 2
      %p183 = scmp.ne.s32.totalorder %s178, %s180
      %p184 = scmp.eq.s32.totalorder %s18, 0
      %p185 = por %p183, %p184
      %p186 = scmp.ne.s32.totalorder %s178, %s180
      %p187 = scmp.eq.s32.totalorder %s23, 2
      %p188 = por %p186, %p187
      %p189 = scmp.ne.s32.totalorder %s180, %s181
      %p190 = scmp.eq.s32.totalorder %s23, 0
      %p191 = por %p189, %p190
      %p192 = scmp.ne.s32.totalorder %s180, %s181
      %p193 = scmp.eq.s32.totalorder %s24, 2
      %p194 = por %p192, %p193
      %p196 = scmp.ne.s32.totalorder %s181, %s195
      %p197 = scmp.eq.s32.totalorder %s24, 0
      %p198 = por %p196, %p197
      %s200 = sadd.s32 %s199, 1
      %p203 = scmp.eq.s32.totalorder %s18, 2
      %p204 = scmp.ne.s32.totalorder %s199, %s201
      %p205 = scmp.eq.s32.totalorder %s18, 0
      %p206 = por %p204, %p205
      %p207 = scmp.ne.s32.totalorder %s199, %s201
      %p208 = scmp.eq.s32.totalorder %s23, 2
      %p209 = por %p207, %p208
      %p210 = scmp.ne.s32.totalorder %s201, %s202
      %p211 = scmp.eq.s32.totalorder %s23, 0
      %p212 = por %p210, %p211
      %p213 = scmp.ne.s32.totalorder %s201, %s202
      %p214 = scmp.eq.s32.totalorder %s24, 2
      %p215 = por %p213, %p214
      %p217 = scmp.ne.s32.totalorder %s202, %s216
      %p218 = scmp.eq.s32.totalorder %s24, 0
      %p219 = por %p217, %p218
      %s220 = ssub.s32 %s18, %s25
      %p221 = scmp.eq.s32.totalorder %s220, 0
      %s223 = sadd.s32 %s222, 1
      %s224 = scalar_select %p221, %s222, %s223
      %p227 = pneg %p221
      %p228 = scmp.eq.s32.totalorder %s18, 2
      %p229 = por %p227, %p228
      %p230 = scmp.ne.s32.totalorder %s222, %s225
      %p231 = scmp.eq.s32.totalorder %s18, 0
      %p232 = por %p230, %p231
      %p233 = scmp.ne.s32.totalorder %s222, %s225
      %p234 = scmp.eq.s32.totalorder %s23, 2
      %p235 = por %p233, %p234
      %p236 = scmp.ne.s32.totalorder %s225, %s226
      %p237 = scmp.eq.s32.totalorder %s23, 0
      %p238 = por %p236, %p237
      %p239 = scmp.ne.s32.totalorder %s225, %s226
      %p240 = scmp.eq.s32.totalorder %s24, 2
      %p241 = por %p239, %p240
      %p243 = scmp.ne.s32.totalorder %s226, %s242
      %p244 = scmp.eq.s32.totalorder %s24, 0
      %p245 = por %p243, %p244
      %p246 = scmp.le.s32.totalorder 1, %s18
      %p247 = scmp.lt.s32.totalorder %s18, 4
      %p248 = pnand %p246, %p247
      %p249 = pneg %p248
      // Predicated region
      $region9: #{tpu_custom_call.1} parent=5 // pred_check
        _
      $region10: #{tpu_custom_call.1} parent=5 // pred_check_branch
        %251 = sbr.rel (%p248) target = $region12
      $region11: #{tpu_custom_call.1} parent=5 // pred_region
        %s252 = ssub.s32 %s18, 1
        // Predicated region
        $region13: #{tpu_custom_call.1} parent=11 // pred_check
          %p253 = pneg %p65
        $region14: #{tpu_custom_call.1} parent=11 // pred_check_branch
          %255 = sbr.rel (%p253) target = $region16
        $region15: #{tpu_custom_call.1} parent=11 // pred_region
          _
        $region16: #{tpu_custom_call.1} parent=11 // pred_fallthru
          _
        // Predicated region
        $region17: #{tpu_custom_call.1} parent=11 // pred_check
          %p256 = pneg %p86
        $region18: #{tpu_custom_call.1} parent=11 // pred_check_branch
          %258 = sbr.rel (%p256) target = $region20
        $region19: #{tpu_custom_call.1} parent=11 // pred_region
          _
        $region20: #{tpu_custom_call.1} parent=11 // pred_fallthru
          _
        // Predicated region
        $region21: #{tpu_custom_call.1} parent=11 // pred_check
          %p259 = pneg %p107
        $region22: #{tpu_custom_call.1} parent=11 // pred_check_branch
          %261 = sbr.rel (%p259) target = $region24
        $region23: #{tpu_custom_call.1} parent=11 // pred_region
          _
        $region24: #{tpu_custom_call.1} parent=11 // pred_fallthru
          _
        // Predicated region
        $region25: #{tpu_custom_call.1} parent=11 // pred_check
          %p262 = pneg %p128
        $region26: #{tpu_custom_call.1} parent=11 // pred_check_branch
          %264 = sbr.rel (%p262) target = $region28
        $region27: #{tpu_custom_call.1} parent=11 // pred_region
          _
        $region28: #{tpu_custom_call.1} parent=11 // pred_fallthru
          _
        // Predicated region
        $region29: #{tpu_custom_call.1} parent=11 // pred_check
          %p265 = pneg %p149
        $region30: #{tpu_custom_call.1} parent=11 // pred_check_branch
          %267 = sbr.rel (%p265) target = $region32
        $region31: #{tpu_custom_call.1} parent=11 // pred_region
          _
        $region32: #{tpu_custom_call.1} parent=11 // pred_fallthru
          _
        // Predicated region
        $region33: #{tpu_custom_call.1} parent=11 // pred_check
          %p268 = pneg %p170
        $region34: #{tpu_custom_call.1} parent=11 // pred_check_branch
          %270 = sbr.rel (%p268) target = $region36
        $region35: #{tpu_custom_call.1} parent=11 // pred_region
          _
        $region36: #{tpu_custom_call.1} parent=11 // pred_fallthru
          _
        // Predicated region
        $region37: #{tpu_custom_call.1} parent=11 // pred_check
          %p271 = pneg %p191
        $region38: #{tpu_custom_call.1} parent=11 // pred_check_branch
          %273 = sbr.rel (%p271) target = $region40
        $region39: #{tpu_custom_call.1} parent=11 // pred_region
          _
        $region40: #{tpu_custom_call.1} parent=11 // pred_fallthru
          _
        // Predicated region
        $region41: #{tpu_custom_call.1} parent=11 // pred_check
          %p274 = pneg %p212
        $region42: #{tpu_custom_call.1} parent=11 // pred_check_branch
          %276 = sbr.rel (%p274) target = $region44
        $region43: #{tpu_custom_call.1} parent=11 // pred_region
          _
        $region44: #{tpu_custom_call.1} parent=11 // pred_fallthru
          _
      $region12: #{tpu_custom_call.1} parent=5 // pred_fallthru
        _
      %p277 = scmp.lt.s32.totalorder %s18, 3
      // Predicated region
      $region45: #{tpu_custom_call.1} parent=5 // pred_check
        %p278 = pneg %p277
      $region46: #{tpu_custom_call.1} parent=5 // pred_check_branch
        %280 = sbr.rel (%p278) target = $region48
      $region47: #{tpu_custom_call.1} parent=5 // pred_region
        // Predicated region
        $region49: #{tpu_custom_call.1} parent=47 // pred_check
          %p281 = pneg %p38
        $region50: #{tpu_custom_call.1} parent=47 // pred_check_branch
          %283 = sbr.rel (%p281) target = $region52
        $region51: #{tpu_custom_call.1} parent=47 // pred_region
          %p284 = scmp.lt.s32.totalorder %s18, 2
          %s285 = scalar_select %p284, %s18, 2
          %s286 = smul.addr %s285, 8
          %s287 = scalar_lea.vmem %s0, %s286
        $region52: #{tpu_custom_call.1} parent=47 // pred_fallthru
          _
      $region48: #{tpu_custom_call.1} parent=5 // pred_fallthru
        _
      %p288 = scmp.le.s32.totalorder 1, %s18
      %p289 = scmp.lt.s32.totalorder %s18, 4
      %p290 = pnand %p288, %p289
      %p291 = pneg %p290
      // Predicated region
      $region53: #{tpu_custom_call.1} parent=5 // pred_check
        _
      $region54: #{tpu_custom_call.1} parent=5 // pred_check_branch
        %293 = sbr.rel (%p290) target = $region56
      $region55: #{tpu_custom_call.1} parent=5 // pred_region
        %s294 = ssub.s32 %s18, 1
        %p295 = scmp.lt.s32.totalorder %s23, 2
        %s296 = scalar_select %p295, %s23, 2
        %s297 = smul.addr %s296, 8
        %s298 = scalar_lea.vmem %s0, %s297
        %p299 = pneg %p44
        %p300 = pneg %p41
        %p301 = pneg %p65
        %p302 = pneg %p62
        %p303 = pneg %p86
        %p304 = pneg %p83
        %p305 = pneg %p107
        %p306 = pneg %p104
        %p307 = pneg %p128
        %p308 = pneg %p125
        %p309 = pneg %p149
        %p310 = pneg %p146
        %p311 = pneg %p170
        %p312 = pneg %p167
        %p313 = pneg %p191
        %p314 = pneg %p188
        %p315 = pneg %p212
        %p316 = pneg %p209
        %p317 = pneg %p238
        %p318 = pneg %p235
        %s319 = sand.u32 %s225, 1
        %s320 = scalar_lea.sflag [#allocation3], %s319
        %s321 = sand.u32 %s225, 1
        %s322 = smul.addr %s321, 8
        %s323 = scalar_lea.vmem [#allocation2], %s322
        %p324 = scmp.lt.s32.totalorder %s23, 2
        %s325 = scalar_select %p324, %s23, 2
        %s326 = smul.addr %s325, 8
        %s327 = scalar_lea.vmem %s0, %s326
        %v328 = vld [vmem:[%s327] sm:$0xff]
        %v329 = vld [vmem:[%s1] sm:$0xff]
        %v330 = vld [vmem:[%s1 + $0x8] sm:$0xff]
        %v331 = vld [vmem:[%s1 + $0x10] sm:$0xff]
        %v332 = vld [vmem:[%s1 + $0x18] sm:$0xff]
        %v333 = vld [vmem:[%s1 + $0x20] sm:$0xf]
        %v334 = vld [vmem:[%s2] sm:$0x1]
        %v336 = vperm.slane %v334, 0
        %vm338 = vcmask 293888
        %v340 = vsel %vm338, %v328, 0
        %vm342 = vcmask 1043456
        %v344 = vsel %vm342, %v333, 0
        %346 = vmatpush.msra.mxu0 0.0
        %347 = vmatpush.msra.mxu0 0.0
        %348 = vmatpush.msra.mxu0 0.0
        %349 = vmatpush.msra.mxu0 0.0
        %350 = vmatpush.msra.mxu0 0.0
        %351 = vmatpush.msra.mxu0 0.0
        %352 = vmatpush.msra.mxu0 0.0
        %353 = vmatpush.msra.mxu0 0.0
        %354 = vmatpush.msra.mxu0 0.0
        %355 = vmatpush.msra.mxu0 0.0
        %356 = vmatpush.msra.mxu0 0.0
        %v357 = vand.u32 %v344, 4294901760
        %358 = vmatpush.msra.mxu0 %v357
        %v359 = vand.u32 %v332, 4294901760
        %360 = vmatpush.msra.mxu0 %v359
        %v361 = vand.u32 %v331, 4294901760
        %362 = vmatpush.msra.mxu0 %v361
        %v363 = vand.u32 %v330, 4294901760
        %364 = vmatpush.msra.mxu0 %v363
        %v365 = vand.u32 %v329, 4294901760
        %366 = vmatpush.msra.mxu0 %v365
        %v367 = vand.u32 %v340, 4294901760
        %v368 = vsub.f32 %v340, %v367
        %v369 = vand.u32 %v368, 4294901760
        %v370 = vsub.f32 %v368, %v369
        %v371 = vand.u32 %v370, 4294901760
        %372 = vmatmul.f32.gmra.mxu0 %v371
        %v373 = vpop.f32.mrf.mxu0
        %v374 = vadd.f32 %v336, %v373
        %375 = vdwg.mxu0
        %376 = vmatpush.msra.mxu0 0.0
        %377 = vmatpush.msra.mxu0 0.0
        %378 = vmatpush.msra.mxu0 0.0
        %379 = vmatpush.msra.mxu0 0.0
        %380 = vmatpush.msra.mxu0 0.0
        %381 = vmatpush.msra.mxu0 0.0
        %382 = vmatpush.msra.mxu0 0.0
        %383 = vmatpush.msra.mxu0 0.0
        %384 = vmatpush.msra.mxu0 0.0
        %385 = vmatpush.msra.mxu0 0.0
        %386 = vmatpush.msra.mxu0 0.0
        %v387 = vand.u32 %v344, 4294901760
        %v388 = vsub.f32 %v344, %v387
        %v389 = vand.u32 %v388, 4294901760
        %v390 = vsub.f32 %v388, %v389
        %v391 = vand.u32 %v390, 4294901760
        %392 = vmatpush.msra.mxu0 %v391
        %v393 = vand.u32 %v332, 4294901760
        %v394 = vsub.f32 %v332, %v393
        %v395 = vand.u32 %v394, 4294901760
        %v396 = vsub.f32 %v394, %v395
        %v397 = vand.u32 %v396, 4294901760
        %398 = vmatpush.msra.mxu0 %v397
        %v399 = vand.u32 %v331, 4294901760
        %v400 = vsub.f32 %v331, %v399
        %v401 = vand.u32 %v400, 4294901760
        %v402 = vsub.f32 %v400, %v401
        %v403 = vand.u32 %v402, 4294901760
        %404 = vmatpush.msra.mxu0 %v403
        %v405 = vand.u32 %v330, 4294901760
        %v406 = vsub.f32 %v330, %v405
        %v407 = vand.u32 %v406, 4294901760
        %v408 = vsub.f32 %v406, %v407
        %v409 = vand.u32 %v408, 4294901760
        %410 = vmatpush.msra.mxu0 %v409
        %v411 = vand.u32 %v329, 4294901760
        %v412 = vsub.f32 %v329, %v411
        %v413 = vand.u32 %v412, 4294901760
        %v414 = vsub.f32 %v412, %v413
        %v415 = vand.u32 %v414, 4294901760
        %416 = vmatpush.msra.mxu0 %v415
        %v417 = vand.u32 %v340, 4294901760
        %418 = vmatmul.f32.gmra.mxu0 %v417
        %v419 = vpop.f32.mrf.mxu0
        %v420 = vadd.f32 %v374, %v419
        %421 = vdwg.mxu0
        %422 = vmatpush.msra.mxu0 0.0
        %423 = vmatpush.msra.mxu0 0.0
        %424 = vmatpush.msra.mxu0 0.0
        %425 = vmatpush.msra.mxu0 0.0
        %426 = vmatpush.msra.mxu0 0.0
        %427 = vmatpush.msra.mxu0 0.0
        %428 = vmatpush.msra.mxu0 0.0
        %429 = vmatpush.msra.mxu0 0.0
        %430 = vmatpush.msra.mxu0 0.0
        %431 = vmatpush.msra.mxu0 0.0
        %432 = vmatpush.msra.mxu0 0.0
        %v433 = vand.u32 %v344, 4294901760
        %v434 = vsub.f32 %v344, %v433
        %435 = vmatpush.msra.mxu0 %v434
        %v436 = vand.u32 %v332, 4294901760
        %v437 = vsub.f32 %v332, %v436
        %438 = vmatpush.msra.mxu0 %v437
        %v439 = vand.u32 %v331, 4294901760
        %v440 = vsub.f32 %v331, %v439
        %441 = vmatpush.msra.mxu0 %v440
        %v442 = vand.u32 %v330, 4294901760
        %v443 = vsub.f32 %v330, %v442
        %444 = vmatpush.msra.mxu0 %v443
        %v445 = vand.u32 %v329, 4294901760
        %v446 = vsub.f32 %v329, %v445
        %447 = vmatpush.msra.mxu0 %v446
        %v448 = vand.u32 %v340, 4294901760
        %v449 = vsub.f32 %v340, %v448
        %450 = vmatmul.f32.gmra.mxu0 %v449
        %v451 = vpop.f32.mrf.mxu0
        %v452 = vadd.f32 %v420, %v451
        %453 = vdwg.mxu0
        %454 = vmatpush.msra.mxu0 0.0
        %455 = vmatpush.msra.mxu0 0.0
        %456 = vmatpush.msra.mxu0 0.0
        %457 = vmatpush.msra.mxu0 0.0
        %458 = vmatpush.msra.mxu0 0.0
        %459 = vmatpush.msra.mxu0 0.0
        %460 = vmatpush.msra.mxu0 0.0
        %461 = vmatpush.msra.mxu0 0.0
        %462 = vmatpush.msra.mxu0 0.0
        %463 = vmatpush.msra.mxu0 0.0
        %464 = vmatpush.msra.mxu0 0.0
        %v465 = vand.u32 %v344, 4294901760
        %466 = vmatpush.msra.mxu0 %v465
        %v467 = vand.u32 %v332, 4294901760
        %468 = vmatpush.msra.mxu0 %v467
        %v469 = vand.u32 %v331, 4294901760
        %470 = vmatpush.msra.mxu0 %v469
        %v471 = vand.u32 %v330, 4294901760
        %472 = vmatpush.msra.mxu0 %v471
        %v473 = vand.u32 %v329, 4294901760
        %474 = vmatpush.msra.mxu0 %v473
        %v475 = vand.u32 %v340, 4294901760
        %v476 = vsub.f32 %v340, %v475
        %v477 = vand.u32 %v476, 4294901760
        %478 = vmatmul.f32.gmra.mxu0 %v477
        %v479 = vpop.f32.mrf.mxu0
        %v480 = vadd.f32 %v452, %v479
        %481 = vdwg.mxu0
        %482 = vmatpush.msra.mxu0 0.0
        %483 = vmatpush.msra.mxu0 0.0
        %484 = vmatpush.msra.mxu0 0.0
        %485 = vmatpush.msra.mxu0 0.0
        %486 = vmatpush.msra.mxu0 0.0
        %487 = vmatpush.msra.mxu0 0.0
        %488 = vmatpush.msra.mxu0 0.0
        %489 = vmatpush.msra.mxu0 0.0
        %490 = vmatpush.msra.mxu0 0.0
        %491 = vmatpush.msra.mxu0 0.0
        %492 = vmatpush.msra.mxu0 0.0
        %v493 = vand.u32 %v344, 4294901760
        %v494 = vsub.f32 %v344, %v493
        %v495 = vand.u32 %v494, 4294901760
        %496 = vmatpush.msra.mxu0 %v495
        %v497 = vand.u32 %v332, 4294901760
        %v498 = vsub.f32 %v332, %v497
        %v499 = vand.u32 %v498, 4294901760
        %500 = vmatpush.msra.mxu0 %v499
        %v501 = vand.u32 %v331, 4294901760
        %v502 = vsub.f32 %v331, %v501
        %v503 = vand.u32 %v502, 4294901760
        %504 = vmatpush.msra.mxu0 %v503
        %v505 = vand.u32 %v330, 4294901760
        %v506 = vsub.f32 %v330, %v505
        %v507 = vand.u32 %v506, 4294901760
        %508 = vmatpush.msra.mxu0 %v507
        %v509 = vand.u32 %v329, 4294901760
        %v510 = vsub.f32 %v329, %v509
        %v511 = vand.u32 %v510, 4294901760
        %512 = vmatpush.msra.mxu0 %v511
        %v513 = vand.u32 %v340, 4294901760
        %514 = vmatmul.f32.gmra.mxu0 %v513
        %v515 = vpop.f32.mrf.mxu0
        %v516 = vadd.f32 %v480, %v515
        %517 = vdwg.mxu0
        %518 = vmatpush.msra.mxu0 0.0
        %519 = vmatpush.msra.mxu0 0.0
        %520 = vmatpush.msra.mxu0 0.0
        %521 = vmatpush.msra.mxu0 0.0
        %522 = vmatpush.msra.mxu0 0.0
        %523 = vmatpush.msra.mxu0 0.0
        %524 = vmatpush.msra.mxu0 0.0
        %525 = vmatpush.msra.mxu0 0.0
        %526 = vmatpush.msra.mxu0 0.0
        %527 = vmatpush.msra.mxu0 0.0
        %528 = vmatpush.msra.mxu0 0.0
        %v529 = vand.u32 %v344, 4294901760
        %530 = vmatpush.msra.mxu0 %v529
        %v531 = vand.u32 %v332, 4294901760
        %532 = vmatpush.msra.mxu0 %v531
        %v533 = vand.u32 %v331, 4294901760
        %534 = vmatpush.msra.mxu0 %v533
        %v535 = vand.u32 %v330, 4294901760
        %536 = vmatpush.msra.mxu0 %v535
        %v537 = vand.u32 %v329, 4294901760
        %538 = vmatpush.msra.mxu0 %v537
        %v539 = vand.u32 %v340, 4294901760
        %540 = vmatmul.f32.gmra.mxu0 %v539
        %v541 = vpop.f32.mrf.mxu0
        %v542 = vadd.f32 %v516, %v541
        %543 = vdwg.mxu0
        %544 = vadd.xlane.f32.xlu0 %v542
        %v545 = vpop.xlane.xlu0 %544
        %v546 = vrcp.pop 128.0
        %v547 = vmul.f32 128.0, %v546
        %v548 = vsub.f32 1.0, %v547
        %v549 = vmul.f32 %v546, %v548
        %v550 = vadd.f32 %v546, %v549
        %vm551 = vweird.f32 %v546
        %v552 = vsel %vm551, %v546, %v550
        %v553 = vmul.f32 %v545, %v552
        %v554 = vmul.f32 %v542, %v542
        %555 = vadd.xlane.f32.xlu0 %v554
        %v556 = vpop.xlane.xlu0 %555
        %v557 = vmul.f32 %v556, %v552
        %v558 = vmul.f32 %v553, %v553
        %v559 = vsub.f32 %v557, %v558
        %v560 = vsub.f32 %v542, %v553
        %v561 = vadd.f32 %v559, 1e-05
        %v562 = vrsqrt.pop %v561
        %v563 = vmul.f32 %v562, %v561
        %v564 = vmul.f32 %v563, %v562
        %v565 = vmul.f32 0.5, %v564
        %v566 = vsub.f32 1.5, %v565
        %v567 = vmul.f32 %v562, %v566
        %vm568 = vweird.f32 %v561
        %vm569 = vweird.f32 %v562
        %vm570 = vmor %vm568, %vm569
        %v571 = vsel %vm570, %v562, %v567
        %v572 = vmul.f32 %v560, %v571
        %v573 = vld [vmem:[%s3] sm:$0x1]
        %v575 = vperm.slane %v573, 0
        %v577 = vmul.f32 %v572, %v575
        %v578 = vld [vmem:[%s4] sm:$0x1]
        %v580 = vperm.slane %v578, 0
        %v582 = vadd.f32 %v577, %v580
        %v583 = vmax.f32 %v582, 0.0
        %v584 = vld [vmem:[%s5] sm:$0xff]
        %v585 = vld [vmem:[%s5 + $0x8] sm:$0xff]
        %v586 = vld [vmem:[%s5 + $0x10] sm:$0xff]
        %v587 = vld [vmem:[%s5 + $0x18] sm:$0xff]
        %v588 = vld [vmem:[%s5 + $0x20] sm:$0xff]
        %v589 = vld [vmem:[%s5 + $0x28] sm:$0xff]
        %v590 = vld [vmem:[%s5 + $0x30] sm:$0xff]
        %v591 = vld [vmem:[%s5 + $0x38] sm:$0xff]
        %v592 = vld [vmem:[%s5 + $0x40] sm:$0xff]
        %v593 = vld [vmem:[%s5 + $0x48] sm:$0xff]
        %v594 = vld [vmem:[%s5 + $0x50] sm:$0xff]
        %v595 = vld [vmem:[%s5 + $0x58] sm:$0xff]
        %v596 = vld [vmem:[%s5 + $0x60] sm:$0xff]
        %v597 = vld [vmem:[%s5 + $0x68] sm:$0xff]
        %v598 = vld [vmem:[%s5 + $0x70] sm:$0xff]
        %v599 = vld [vmem:[%s5 + $0x78] sm:$0xff]
        %v600 = vld [vmem:[%s6] sm:$0x1]
        %v602 = vperm.slane %v600, 0
        %v604 = vand.u32 %v599, 4294901760
        %605 = vmatpush.msra.mxu0 %v604
        %v606 = vand.u32 %v598, 4294901760
        %607 = vmatpush.msra.mxu0 %v606
        %v608 = vand.u32 %v597, 4294901760
        %609 = vmatpush.msra.mxu0 %v608
        %v610 = vand.u32 %v596, 4294901760
        %611 = vmatpush.msra.mxu0 %v610
        %v612 = vand.u32 %v595, 4294901760
        %613 = vmatpush.msra.mxu0 %v612
        %v614 = vand.u32 %v594, 4294901760
        %615 = vmatpush.msra.mxu0 %v614
        %v616 = vand.u32 %v593, 4294901760
        %617 = vmatpush.msra.mxu0 %v616
        %v618 = vand.u32 %v592, 4294901760
        %619 = vmatpush.msra.mxu0 %v618
        %v620 = vand.u32 %v591, 4294901760
        %621 = vmatpush.msra.mxu0 %v620
        %v622 = vand.u32 %v590, 4294901760
        %623 = vmatpush.msra.mxu0 %v622
        %v624 = vand.u32 %v589, 4294901760
        %625 = vmatpush.msra.mxu0 %v624
        %v626 = vand.u32 %v588, 4294901760
        %627 = vmatpush.msra.mxu0 %v626
        %v628 = vand.u32 %v587, 4294901760
        %629 = vmatpush.msra.mxu0 %v628
        %v630 = vand.u32 %v586, 4294901760
        %631 = vmatpush.msra.mxu0 %v630
        %v632 = vand.u32 %v585, 4294901760
        %633 = vmatpush.msra.mxu0 %v632
        %v634 = vand.u32 %v584, 4294901760
        %635 = vmatpush.msra.mxu0 %v634
        %v636 = vand.u32 %v583, 4294901760
        %v637 = vsub.f32 %v583, %v636
        %v638 = vand.u32 %v637, 4294901760
        %v639 = vsub.f32 %v637, %v638
        %v640 = vand.u32 %v639, 4294901760
        %641 = vmatmul.f32.gmra.mxu0 %v640
        %v642 = vpop.f32.mrf.mxu0
        %v643 = vadd.f32 %v602, %v642
        %644 = vdwg.mxu0
        %v645 = vand.u32 %v599, 4294901760
        %v646 = vsub.f32 %v599, %v645
        %v647 = vand.u32 %v646, 4294901760
        %v648 = vsub.f32 %v646, %v647
        %v649 = vand.u32 %v648, 4294901760
        %650 = vmatpush.msra.mxu0 %v649
        %v651 = vand.u32 %v598, 4294901760
        %v652 = vsub.f32 %v598, %v651
        %v653 = vand.u32 %v652, 4294901760
        %v654 = vsub.f32 %v652, %v653
        %v655 = vand.u32 %v654, 4294901760
        %656 = vmatpush.msra.mxu0 %v655
        %v657 = vand.u32 %v597, 4294901760
        %v658 = vsub.f32 %v597, %v657
        %v659 = vand.u32 %v658, 4294901760
        %v660 = vsub.f32 %v658, %v659
        %v661 = vand.u32 %v660, 4294901760
        %662 = vmatpush.msra.mxu0 %v661
        %v663 = vand.u32 %v596, 4294901760
        %v664 = vsub.f32 %v596, %v663
        %v665 = vand.u32 %v664, 4294901760
        %v666 = vsub.f32 %v664, %v665
        %v667 = vand.u32 %v666, 4294901760
        %668 = vmatpush.msra.mxu0 %v667
        %v669 = vand.u32 %v595, 4294901760
        %v670 = vsub.f32 %v595, %v669
        %v671 = vand.u32 %v670, 4294901760
        %v672 = vsub.f32 %v670, %v671
        %v673 = vand.u32 %v672, 4294901760
        %674 = vmatpush.msra.mxu0 %v673
        %v675 = vand.u32 %v594, 4294901760
        %v676 = vsub.f32 %v594, %v675
        %v677 = vand.u32 %v676, 4294901760
        %v678 = vsub.f32 %v676, %v677
        %v679 = vand.u32 %v678, 4294901760
        %680 = vmatpush.msra.mxu0 %v679
        %v681 = vand.u32 %v593, 4294901760
        %v682 = vsub.f32 %v593, %v681
        %v683 = vand.u32 %v682, 4294901760
        %v684 = vsub.f32 %v682, %v683
        %v685 = vand.u32 %v684, 4294901760
        %686 = vmatpush.msra.mxu0 %v685
        %v687 = vand.u32 %v592, 4294901760
        %v688 = vsub.f32 %v592, %v687
        %v689 = vand.u32 %v688, 4294901760
        %v690 = vsub.f32 %v688, %v689
        %v691 = vand.u32 %v690, 4294901760
        %692 = vmatpush.msra.mxu0 %v691
        %v693 = vand.u32 %v591, 4294901760
        %v694 = vsub.f32 %v591, %v693
        %v695 = vand.u32 %v694, 4294901760
        %v696 = vsub.f32 %v694, %v695
        %v697 = vand.u32 %v696, 4294901760
        %698 = vmatpush.msra.mxu0 %v697
        %v699 = vand.u32 %v590, 4294901760
        %v700 = vsub.f32 %v590, %v699
        %v701 = vand.u32 %v700, 4294901760
        %v702 = vsub.f32 %v700, %v701
        %v703 = vand.u32 %v702, 4294901760
        %704 = vmatpush.msra.mxu0 %v703
        %v705 = vand.u32 %v589, 4294901760
        %v706 = vsub.f32 %v589, %v705
        %v707 = vand.u32 %v706, 4294901760
        %v708 = vsub.f32 %v706, %v707
        %v709 = vand.u32 %v708, 4294901760
        %710 = vmatpush.msra.mxu0 %v709
        %v711 = vand.u32 %v588, 4294901760
        %v712 = vsub.f32 %v588, %v711
        %v713 = vand.u32 %v712, 4294901760
        %v714 = vsub.f32 %v712, %v713
        %v715 = vand.u32 %v714, 4294901760
        %716 = vmatpush.msra.mxu0 %v715
        %v717 = vand.u32 %v587, 4294901760
        %v718 = vsub.f32 %v587, %v717
        %v719 = vand.u32 %v718, 4294901760
        %v720 = vsub.f32 %v718, %v719
        %v721 = vand.u32 %v720, 4294901760
        %722 = vmatpush.msra.mxu0 %v721
        %v723 = vand.u32 %v586, 4294901760
        %v724 = vsub.f32 %v586, %v723
        %v725 = vand.u32 %v724, 4294901760
        %v726 = vsub.f32 %v724, %v725
        %v727 = vand.u32 %v726, 4294901760
        %728 = vmatpush.msra.mxu0 %v727
        %v729 = vand.u32 %v585, 4294901760
        %v730 = vsub.f32 %v585, %v729
        %v731 = vand.u32 %v730, 4294901760
        %v732 = vsub.f32 %v730, %v731
        %v733 = vand.u32 %v732, 4294901760
        %734 = vmatpush.msra.mxu0 %v733
        %v735 = vand.u32 %v584, 4294901760
        %v736 = vsub.f32 %v584, %v735
        %v737 = vand.u32 %v736, 4294901760
        %v738 = vsub.f32 %v736, %v737
        %v739 = vand.u32 %v738, 4294901760
        %740 = vmatpush.msra.mxu0 %v739
        %v741 = vand.u32 %v583, 4294901760
        %742 = vmatmul.f32.gmra.mxu0 %v741
        %v743 = vpop.f32.mrf.mxu0
        %v744 = vadd.f32 %v643, %v743
        %745 = vdwg.mxu0
        %v746 = vand.u32 %v599, 4294901760
        %v747 = vsub.f32 %v599, %v746
        %748 = vmatpush.msra.mxu0 %v747
        %v749 = vand.u32 %v598, 4294901760
        %v750 = vsub.f32 %v598, %v749
        %751 = vmatpush.msra.mxu0 %v750
        %v752 = vand.u32 %v597, 4294901760
        %v753 = vsub.f32 %v597, %v752
        %754 = vmatpush.msra.mxu0 %v753
        %v755 = vand.u32 %v596, 4294901760
        %v756 = vsub.f32 %v596, %v755
        %757 = vmatpush.msra.mxu0 %v756
        %v758 = vand.u32 %v595, 4294901760
        %v759 = vsub.f32 %v595, %v758
        %760 = vmatpush.msra.mxu0 %v759
        %v761 = vand.u32 %v594, 4294901760
        %v762 = vsub.f32 %v594, %v761
        %763 = vmatpush.msra.mxu0 %v762
        %v764 = vand.u32 %v593, 4294901760
        %v765 = vsub.f32 %v593, %v764
        %766 = vmatpush.msra.mxu0 %v765
        %v767 = vand.u32 %v592, 4294901760
        %v768 = vsub.f32 %v592, %v767
        %769 = vmatpush.msra.mxu0 %v768
        %v770 = vand.u32 %v591, 4294901760
        %v771 = vsub.f32 %v591, %v770
        %772 = vmatpush.msra.mxu0 %v771
        %v773 = vand.u32 %v590, 4294901760
        %v774 = vsub.f32 %v590, %v773
        %775 = vmatpush.msra.mxu0 %v774
        %v776 = vand.u32 %v589, 4294901760
        %v777 = vsub.f32 %v589, %v776
        %778 = vmatpush.msra.mxu0 %v777
        %v779 = vand.u32 %v588, 4294901760
        %v780 = vsub.f32 %v588, %v779
        %781 = vmatpush.msra.mxu0 %v780
        %v782 = vand.u32 %v587, 4294901760
        %v783 = vsub.f32 %v587, %v782
        %784 = vmatpush.msra.mxu0 %v783
        %v785 = vand.u32 %v586, 4294901760
        %v786 = vsub.f32 %v586, %v785
        %787 = vmatpush.msra.mxu0 %v786
        %v788 = vand.u32 %v585, 4294901760
        %v789 = vsub.f32 %v585, %v788
        %790 = vmatpush.msra.mxu0 %v789
        %v791 = vand.u32 %v584, 4294901760
        %v792 = vsub.f32 %v584, %v791
        %793 = vmatpush.msra.mxu0 %v792
        %v794 = vand.u32 %v583, 4294901760
        %v795 = vsub.f32 %v583, %v794
        %796 = vmatmul.f32.gmra.mxu0 %v795
        %v797 = vpop.f32.mrf.mxu0
        %v798 = vadd.f32 %v744, %v797
        %799 = vdwg.mxu0
        %v800 = vand.u32 %v599, 4294901760
        %801 = vmatpush.msra.mxu0 %v800
        %v802 = vand.u32 %v598, 4294901760
        %803 = vmatpush.msra.mxu0 %v802
        %v804 = vand.u32 %v597, 4294901760
        %805 = vmatpush.msra.mxu0 %v804
        %v806 = vand.u32 %v596, 4294901760
        %807 = vmatpush.msra.mxu0 %v806
        %v808 = vand.u32 %v595, 4294901760
        %809 = vmatpush.msra.mxu0 %v808
        %v810 = vand.u32 %v594, 4294901760
        %811 = vmatpush.msra.mxu0 %v810
        %v812 = vand.u32 %v593, 4294901760
        %813 = vmatpush.msra.mxu0 %v812
        %v814 = vand.u32 %v592, 4294901760
        %815 = vmatpush.msra.mxu0 %v814
        %v816 = vand.u32 %v591, 4294901760
        %817 = vmatpush.msra.mxu0 %v816
        %v818 = vand.u32 %v590, 4294901760
        %819 = vmatpush.msra.mxu0 %v818
        %v820 = vand.u32 %v589, 4294901760
        %821 = vmatpush.msra.mxu0 %v820
        %v822 = vand.u32 %v588, 4294901760
        %823 = vmatpush.msra.mxu0 %v822
        %v824 = vand.u32 %v587, 4294901760
        %825 = vmatpush.msra.mxu0 %v824
        %v826 = vand.u32 %v586, 4294901760
        %827 = vmatpush.msra.mxu0 %v826
        %v828 = vand.u32 %v585, 4294901760
        %829 = vmatpush.msra.mxu0 %v828
        %v830 = vand.u32 %v584, 4294901760
        %831 = vmatpush.msra.mxu0 %v830
        %v832 = vand.u32 %v583, 4294901760
        %v833 = vsub.f32 %v583, %v832
        %v834 = vand.u32 %v833, 4294901760
        %835 = vmatmul.f32.gmra.mxu0 %v834
        %v836 = vpop.f32.mrf.mxu0
        %v837 = vadd.f32 %v798, %v836
        %838 = vdwg.mxu0
        %v839 = vand.u32 %v599, 4294901760
        %v840 = vsub.f32 %v599, %v839
        %v841 = vand.u32 %v840, 4294901760
        %842 = vmatpush.msra.mxu0 %v841
        %v843 = vand.u32 %v598, 4294901760
        %v844 = vsub.f32 %v598, %v843
        %v845 = vand.u32 %v844, 4294901760
        %846 = vmatpush.msra.mxu0 %v845
        %v847 = vand.u32 %v597, 4294901760
        %v848 = vsub.f32 %v597, %v847
        %v849 = vand.u32 %v848, 4294901760
        %850 = vmatpush.msra.mxu0 %v849
        %v851 = vand.u32 %v596, 4294901760
        %v852 = vsub.f32 %v596, %v851
        %v853 = vand.u32 %v852, 4294901760
        %854 = vmatpush.msra.mxu0 %v853
        %v855 = vand.u32 %v595, 4294901760
        %v856 = vsub.f32 %v595, %v855
        %v857 = vand.u32 %v856, 4294901760
        %858 = vmatpush.msra.mxu0 %v857
        %v859 = vand.u32 %v594, 4294901760
        %v860 = vsub.f32 %v594, %v859
        %v861 = vand.u32 %v860, 4294901760
        %862 = vmatpush.msra.mxu0 %v861
        %v863 = vand.u32 %v593, 4294901760
        %v864 = vsub.f32 %v593, %v863
        %v865 = vand.u32 %v864, 4294901760
        %866 = vmatpush.msra.mxu0 %v865
        %v867 = vand.u32 %v592, 4294901760
        %v868 = vsub.f32 %v592, %v867
        %v869 = vand.u32 %v868, 4294901760
        %870 = vmatpush.msra.mxu0 %v869
        %v871 = vand.u32 %v591, 4294901760
        %v872 = vsub.f32 %v591, %v871
        %v873 = vand.u32 %v872, 4294901760
        %874 = vmatpush.msra.mxu0 %v873
        %v875 = vand.u32 %v590, 4294901760
        %v876 = vsub.f32 %v590, %v875
        %v877 = vand.u32 %v876, 4294901760
        %878 = vmatpush.msra.mxu0 %v877
        %v879 = vand.u32 %v589, 4294901760
        %v880 = vsub.f32 %v589, %v879
        %v881 = vand.u32 %v880, 4294901760
        %882 = vmatpush.msra.mxu0 %v881
        %v883 = vand.u32 %v588, 4294901760
        %v884 = vsub.f32 %v588, %v883
        %v885 = vand.u32 %v884, 4294901760
        %886 = vmatpush.msra.mxu0 %v885
        %v887 = vand.u32 %v587, 4294901760
        %v888 = vsub.f32 %v587, %v887
        %v889 = vand.u32 %v888, 4294901760
        %890 = vmatpush.msra.mxu0 %v889
        %v891 = vand.u32 %v586, 4294901760
        %v892 = vsub.f32 %v586, %v891
        %v893 = vand.u32 %v892, 4294901760
        %894 = vmatpush.msra.mxu0 %v893
        %v895 = vand.u32 %v585, 4294901760
        %v896 = vsub.f32 %v585, %v895
        %v897 = vand.u32 %v896, 4294901760
        %898 = vmatpush.msra.mxu0 %v897
        %v899 = vand.u32 %v584, 4294901760
        %v900 = vsub.f32 %v584, %v899
        %v901 = vand.u32 %v900, 4294901760
        %902 = vmatpush.msra.mxu0 %v901
        %v903 = vand.u32 %v583, 4294901760
        %904 = vmatmul.f32.gmra.mxu0 %v903
        %v905 = vpop.f32.mrf.mxu0
        %v906 = vadd.f32 %v837, %v905
        %907 = vdwg.mxu0
        %v908 = vand.u32 %v599, 4294901760
        %909 = vmatpush.msra.mxu0 %v908
        %v910 = vand.u32 %v598, 4294901760
        %911 = vmatpush.msra.mxu0 %v910
        %v912 = vand.u32 %v597, 4294901760
        %913 = vmatpush.msra.mxu0 %v912
        %v914 = vand.u32 %v596, 4294901760
        %915 = vmatpush.msra.mxu0 %v914
        %v916 = vand.u32 %v595, 4294901760
        %917 = vmatpush.msra.mxu0 %v916
        %v918 = vand.u32 %v594, 4294901760
        %919 = vmatpush.msra.mxu0 %v918
        %v920 = vand.u32 %v593, 4294901760
        %921 = vmatpush.msra.mxu0 %v920
        %v922 = vand.u32 %v592, 4294901760
        %923 = vmatpush.msra.mxu0 %v922
        %v924 = vand.u32 %v591, 4294901760
        %925 = vmatpush.msra.mxu0 %v924
        %v926 = vand.u32 %v590, 4294901760
        %927 = vmatpush.msra.mxu0 %v926
        %v928 = vand.u32 %v589, 4294901760
        %929 = vmatpush.msra.mxu0 %v928
        %v930 = vand.u32 %v588, 4294901760
        %931 = vmatpush.msra.mxu0 %v930
        %v932 = vand.u32 %v587, 4294901760
        %933 = vmatpush.msra.mxu0 %v932
        %v934 = vand.u32 %v586, 4294901760
        %935 = vmatpush.msra.mxu0 %v934
        %v936 = vand.u32 %v585, 4294901760
        %937 = vmatpush.msra.mxu0 %v936
        %v938 = vand.u32 %v584, 4294901760
        %939 = vmatpush.msra.mxu0 %v938
        %v940 = vand.u32 %v583, 4294901760
        %941 = vmatmul.f32.gmra.mxu0 %v940
        %v942 = vpop.f32.mrf.mxu0
        %v943 = vadd.f32 %v906, %v942
        %944 = vdwg.mxu0
        %v945 = vxor.u32 %v943, 2147483648
        %v946 = vmul.f32 %v945, 1.442695
        %v947 = vpow.pop %v946
        %v948 = vadd.f32 %v947, 1.0
        %v949 = vrcp.pop %v948
        %v950 = vmul.f32 %v948, %v949
        %v951 = vsub.f32 1.0, %v950
        %v952 = vmul.f32 %v949, %v951
        %v953 = vadd.f32 %v949, %v952
        %vm954 = vweird.f32 %v948
        %vm955 = vweird.f32 %v949
        %vm956 = vmor %vm954, %vm955
        %v957 = vsel %vm956, %v949, %v953
        %v958 = vand.u32 2147483647, %v948
        %vm959 = vcmp.eq.f32.partialorder %v958, 8.507059e+37
        %v960 = vand.u32 %v948, 2147483648
        %v961 = vor.u32 1.1754944e-38, %v960
        %v962 = vsel %vm959, %v961, %v957
        %v963 = vmul.f32 1.0, %v962
        %v964 = vld [vmem:[%s7] sm:$0x1]
        %v966 = vperm.slane %v964, 0
        %v968 = vmul.f32 %v963, %v966
        %v969 = vld [vmem:[%s8] sm:$0x1]
        %v971 = vperm.slane %v969, 0
        %v973 = vadd.f32 %v968, %v971
        %vm974 = vcmask 523264
        %975 = vst.msk [vmem:[%s323] sm:$0xff] %vm974, %v973
        %s976 = sand.u32 %s225, 1
        %s977 = scalar_lea.sflag [#allocation3], %s976
        %s978 = sand.u32 %s225, 1
        %s979 = smul.addr %s978, 8
        %s980 = scalar_lea.vmem [#allocation2], %s979
        // Predicated region
        $region57: #{tpu_custom_call.1} parent=55 // pred_check
          %p981 = pneg %p235
        $region58: #{tpu_custom_call.1} parent=55 // pred_check_branch
          %983 = sbr.rel (%p981) target = $region60
        $region59: #{tpu_custom_call.1} parent=55 // pred_region
          %985 = vsyncadd %s977, 0
          %s986 = smul.addr %s23, 8
          %s987 = scalar_lea.hbm %s9, %s986
          %s989 = sshll.u32 %s980, 4
          %s990 = int_to_ptr.vmem [resolvable:$true] %s989
          %s991 = sshll.u32 %s987, 4
          %s992 = int_to_ptr.hbm [resolvable:$true] %s991
          %994 = dma.vmem_to_hbm [thread:$0]  %s990, 128, %s992, %s977
        $region60: #{tpu_custom_call.1} parent=55 // pred_fallthru
          _
      $region56: #{tpu_custom_call.1} parent=5 // pred_fallthru
        _
      %p995 = scmp.le.s32.totalorder 2, %s18
      // Predicated region
      $region61: #{tpu_custom_call.1} parent=5 // pred_check
        %p996 = pneg %p995
      $region62: #{tpu_custom_call.1} parent=5 // pred_check_branch
        %998 = sbr.rel (%p996) target = $region64
      $region63: #{tpu_custom_call.1} parent=5 // pred_region
        %s999 = ssub.s32 %s18, 2
        // Predicated region
        $region65: #{tpu_custom_call.1} parent=63 // pred_check
          %p1000 = pneg %p241
        $region66: #{tpu_custom_call.1} parent=63 // pred_check_branch
          %1002 = sbr.rel (%p1000) target = $region68
        $region67: #{tpu_custom_call.1} parent=63 // pred_region
          %s1003 = sand.u32 %s226, 1
          %s1004 = scalar_lea.sflag [#allocation3], %s1003
          %s1005 = sand.u32 %s226, 1
          %s1006 = smul.addr %s1005, 8
          %s1007 = scalar_lea.vmem [#allocation2], %s1006
          %1009 = dma.done %s1004, 128
        $region68: #{tpu_custom_call.1} parent=63 // pred_fallthru
          _
      $region64: #{tpu_custom_call.1} parent=5 // pred_fallthru
        _
    $region6: #{tpu_custom_call.1} parent=1 // loop_footer
      %s22 = sadd.s32 1, %s18
    $region7: #{tpu_custom_call.1} parent=1 // loop_footer_branch
      %17 = sbr.rel target = $region3
    $region8: #{tpu_custom_call.1} parent=1 // loop_exit
      _
    %1010 = vsyncpa [#allocation3], 1
    %s1011 = scalar_lea.sflag [#allocation3], 1
    %1012 = vsyncpa %s1011, 1

</llo_original>
